<compile_context>
chip_gen: v5e
topology: v5e:2x2
jax: 0.10.0
libtpu: 0.0.40
codegen_flags: <defaults>
</compile_context>

<pallas_src>
import functools

import jax
import jax.numpy as jnp
from jax.experimental import pallas as pl
from jax.experimental.pallas import tpu as pltpu


def _conv_taps_kernel(x_ref, w_ref, o_ref, *, wp, n_out):
    """One (batch, row-slab) step of the 2x2-conv-over-parity-planes formulation.

    x_ref: (4C, (R+2)*Wp)  parity-unshuffled padded input slab, spatial flattened
                           row-major over (parity rows, Wp) into the lane dim.
    w_ref: (4, 2C*?, 4C)   per-tap weight matrices, tap t = 2*dy + dx.
    o_ref: (4*Cout, R*Wp)  output slab: final (PixelUnshuffled) channels x flattened
                           (R output rows, Wp columns); column Wp-1 of each row is junk.
    """
    acc = jnp.zeros(o_ref.shape, jnp.float32)
    for t in range(4):
        dy, dx = divmod(t, 2)
        off = dy * wp + dx                       # static shift of this tap
        xt = x_ref[:, pl.ds(off, n_out)]         # (4C, N), native dtype (no cast)
        acc = acc + jnp.dot(w_ref[t], xt, preferred_element_type=jnp.float32)
    o_ref[...] = acc.astype(o_ref.dtype)


def _pick_rows_per_tile(ho, wp, c, esize, budget_bytes=6 * 1024 * 1024):
    """Largest output-row slab whose (double-buffered) blocks fit a VMEM budget.

    Keeps per-step VMEM well under the default scoped limits (16 MiB on v5e,
    32 MiB on v6e/v7x), so no vmem_limit override is needed.
    """
    def vmem_bytes(r):
        in_b = 4 * c * (r + 2) * wp * esize      # input window
        out_b = 4 * (c // 2) * 2 * r * wp * esize  # ~output slab
        acc_b = 2 * c * r * wp * 4               # f32 accumulator
        return 2 * in_b + 2 * out_b + acc_b      # 2x: double buffering

    if vmem_bytes(ho) <= budget_bytes:
        return ho                                # whole image in one slab
    r = max(8, ((ho + 7) // 8) * 8)
    while r > 8 and vmem_bytes(r) > budget_bytes:
        r -= 8
    return min(r, ho)


def downsample(x, weight):
    """MEASNet Downsample forward.

    x:      (B, C, H, W)        NCHW input
    weight: (C//2, C, 3, 3)     Conv2d weight (OIHW, bias=False)
    returns (B, 4*(C//2), H//2, W//2)
    """
    B, C, H, W = x.shape
    Cout = weight.shape[0]
    assert weight.shape == (Cout, C, 3, 3)
    assert H % 2 == 0 and W % 2 == 0

    Cout4 = 4 * Cout                   # final channel count (== 2*C for even C)
    Ho, Wo = H // 2, W // 2
    Wp = Wo + 1                        # parity-plane width incl. right zero-pad column

    esize = jnp.dtype(x.dtype).itemsize
    R = _pick_rows_per_tile(Ho, Wp, C, esize)
    n_tiles = -(-Ho // R)              # cdiv
    Hp2 = n_tiles * R + 2              # parity rows incl. halo / padding rows
    Lw = (R + 2) * Wp                  # input window length per row slab
    n_out = R * Wp                     # output columns per row slab

    # ---- input prep: one pad + parity-unshuffle (channel = 4c + 2i + j), flatten spatial
    xp = jnp.pad(x, ((0, 0), (0, 0), (1, 2 * Hp2 - H - 1), (1, 1)))      # (B,C,2Hp2,2Wp)
    xu = xp.reshape(B, C, Hp2, 2, Wp, 2).transpose(0, 1, 3, 5, 2, 4)      # (B,C,2,2,Hp2,Wp)
    xu = xu.reshape(B, 4 * C, Hp2 * Wp)                                   # (B,4C,Hp2*Wp)
    # Overlapping row-slab windows (2-parity-row halo); tile axis gets its own dim so
    # every Pallas block is a full-extent block in its last two dims.
    xw = jnp.stack(
        [xu[:, :, g * n_out: g * n_out + Lw] for g in range(n_tiles)], axis=1
    )                                                                     # (B,nt,4C,Lw)

    # ---- weights: fold PixelUnshuffle into the conv -> 4 tap matrices over parity planes
    # w2[2*dy+dx, 4*co+2*io+jo, 4*c+2*i+j] = weight[co, c, 2*dy+i-io, 2*dx+j-jo] (0 if OOB)
    wf = jnp.zeros((Cout, 2, 2, C, 4, 4), weight.dtype)
    for io in range(2):
        for jo in range(2):
            wf = wf.at[:, io, jo, :, io:io + 3, jo:jo + 3].set(weight)
    wf = wf.reshape(Cout, 2, 2, C, 2, 2, 2, 2)           # [co, io, jo, c, dy, i, dx, j]
    w2 = wf.transpose(4, 6, 0, 1, 2, 3, 5, 7).reshape(4, Cout4, 4 * C)

    kernel = functools.partial(_conv_taps_kernel, wp=Wp, n_out=n_out)

    z = pl.pallas_call(
        kernel,
        out_shape=jax.ShapeDtypeStruct((B, n_tiles, Cout4, n_out), x.dtype),
        grid_spec=pltpu.PrefetchScalarGridSpec(
            num_scalar_prefetch=0,
            grid=(B, n_tiles),
            in_specs=[
                pl.BlockSpec((None, None, 4 * C, Lw), lambda b, g: (b, g, 0, 0)),
                pl.BlockSpec((4, Cout4, 4 * C), lambda b, g: (0, 0, 0)),  # resident weights
            ],
            out_specs=pl.BlockSpec((None, None, Cout4, n_out),
                                   lambda b, g: (b, g, 0, 0)),
        ),
        compiler_params=pltpu.CompilerParams(
            dimension_semantics=("parallel", "parallel"),
        ),
    )(xw, w2)

    # (B, n_tiles, Cout4, R*Wp) -> (B, Cout4, Ho, Wo): drop padded rows and the junk column.
    y = z.reshape(B, n_tiles, Cout4, R, Wp).transpose(0, 2, 1, 3, 4)
    y = y.reshape(B, Cout4, n_tiles * R, Wp)
    return y[:, :, :Ho, :Wo]


def downsample_ref(x, weight):
    """Pure-JAX reference: Conv2d(3x3, s1, p1, no bias) + PixelUnshuffle(2)."""
    y = jax.lax.conv_general_dilated(
        x, weight, window_strides=(1, 1), padding=((1, 1), (1, 1)),
        dimension_numbers=("NCHW", "OIHW", "NCHW"),
        precision=jax.lax.Precision.HIGHEST)
    B, Co, H, W = y.shape
    y = y.reshape(B, Co, H // 2, 2, W // 2, 2)
    return y.transpose(0, 1, 3, 5, 2, 4).reshape(B, Co * 4, H // 2, W // 2)


if __name__ == "__main__":
    key = jax.random.PRNGKey(0)
    B, C, H, W = 2, 4, 16, 16
    k_x, k_w = jax.random.split(key)

    x = jax.random.normal(k_x, (B, C, H, W), dtype=jnp.float32)
    # Conv2d(C, C//2, 3, bias=False) weight, deterministic init.
    weight = jax.random.normal(k_w, (C // 2, C, 3, 3), dtype=jnp.float32) * (1.0 / (9 * C) ** 0.5)

    out = jax.block_until_ready(downsample(x, weight))

    out_ref = downsample_ref(x, weight)
    assert out.shape == (B, 2 * C, H // 2, W // 2) and out.dtype == x.dtype
    max_err = float(jnp.max(jnp.abs(out - out_ref)))
    assert max_err < 2e-3, max_err

    print("KERNEL_OK")
</pallas_src>

<mosaic_0001>
module attributes {stable_mosaic.version = 11 : i64} {
  func.func @_conv_taps_kernel(%arg0: i32, %arg1: i32, %arg2: memref<1x1x16x90xf32, #tpu.memory_space<vmem>>, %arg3: memref<4x8x16xf32, #tpu.memory_space<vmem>>, %arg4: memref<1x1x8x72xf32, #tpu.memory_space<vmem>>) attributes {dimension_semantics = [#tpu.dimension_semantics<parallel>, #tpu.dimension_semantics<parallel>], iteration_bounds = array<i64: 2, 1>, scalar_prefetch = 0 : i64, scratch_operands = 0 : i64, tpu.core_type = #tpu.core_type<tc>, window_params = [{transform_indices = @transform_0, window_bounds = array<i64: 1, 1, 16, 90>}, {pipeline_mode = #tpu.pipeline_mode<synchronous>, transform_indices = @transform_1, window_bounds = array<i64: 4, 8, 16>}, {transform_indices = @transform_2, window_bounds = array<i64: 1, 1, 8, 72>}]} {
    %cst = arith.constant 0.000000e+00 : f32
    %0 = vector.broadcast %cst : f32 to vector<8x72xf32>
    %c0 = arith.constant 0 : index
    %c0_0 = arith.constant 0 : index
    %c0_1 = arith.constant 0 : index
    %c0_2 = arith.constant 0 : index
    %1 = vector.load %arg2[%c0, %c0_0, %c0_1, %c0_2] : memref<1x1x16x90xf32, #tpu.memory_space<vmem>>, vector<1x1x16x72xf32>
    %2 = vector.shape_cast %1 : vector<1x1x16x72xf32> to vector<16x72xf32>
    %c0_3 = arith.constant 0 : index
    %c0_4 = arith.constant 0 : index
    %c0_5 = arith.constant 0 : index
    %3 = vector.load %arg3[%c0_3, %c0_4, %c0_5] : memref<4x8x16xf32, #tpu.memory_space<vmem>>, vector<1x8x16xf32>
    %4 = vector.shape_cast %3 : vector<1x8x16xf32> to vector<8x16xf32>
    %cst_6 = arith.constant dense<0.000000e+00> : vector<8x72xf32>
    %5 = tpu.matmul %4, %2, %cst_6 {dimension_numbers = #tpu.dot_dimension_numbers<[1], [0], [0], [1], [0, 0, 1, 1], [], []>} : vector<8x16xf32>, vector<16x72xf32>, vector<8x72xf32> -> vector<8x72xf32>
    %6 = arith.addf %0, %5 : vector<8x72xf32>
    %c0_7 = arith.constant 0 : index
    %c0_8 = arith.constant 0 : index
    %c0_9 = arith.constant 0 : index
    %c1 = arith.constant 1 : index
    %7 = vector.load %arg2[%c0_7, %c0_8, %c0_9, %c1] : memref<1x1x16x90xf32, #tpu.memory_space<vmem>>, vector<1x1x16x72xf32>
    %8 = vector.shape_cast %7 : vector<1x1x16x72xf32> to vector<16x72xf32>
    %c1_10 = arith.constant 1 : index
    %c0_11 = arith.constant 0 : index
    %c0_12 = arith.constant 0 : index
    %9 = vector.load %arg3[%c1_10, %c0_11, %c0_12] : memref<4x8x16xf32, #tpu.memory_space<vmem>>, vector<1x8x16xf32>
    %10 = vector.shape_cast %9 : vector<1x8x16xf32> to vector<8x16xf32>
    %cst_13 = arith.constant dense<0.000000e+00> : vector<8x72xf32>
    %11 = tpu.matmul %10, %8, %cst_13 {dimension_numbers = #tpu.dot_dimension_numbers<[1], [0], [0], [1], [0, 0, 1, 1], [], []>} : vector<8x16xf32>, vector<16x72xf32>, vector<8x72xf32> -> vector<8x72xf32>
    %12 = arith.addf %6, %11 : vector<8x72xf32>
    %c0_14 = arith.constant 0 : index
    %c0_15 = arith.constant 0 : index
    %c0_16 = arith.constant 0 : index
    %c9 = arith.constant 9 : index
    %13 = vector.load %arg2[%c0_14, %c0_15, %c0_16, %c9] : memref<1x1x16x90xf32, #tpu.memory_space<vmem>>, vector<1x1x16x72xf32>
    %14 = vector.shape_cast %13 : vector<1x1x16x72xf32> to vector<16x72xf32>
    %c2 = arith.constant 2 : index
    %c0_17 = arith.constant 0 : index
    %c0_18 = arith.constant 0 : index
    %15 = vector.load %arg3[%c2, %c0_17, %c0_18] : memref<4x8x16xf32, #tpu.memory_space<vmem>>, vector<1x8x16xf32>
    %16 = vector.shape_cast %15 : vector<1x8x16xf32> to vector<8x16xf32>
    %cst_19 = arith.constant dense<0.000000e+00> : vector<8x72xf32>
    %17 = tpu.matmul %16, %14, %cst_19 {dimension_numbers = #tpu.dot_dimension_numbers<[1], [0], [0], [1], [0, 0, 1, 1], [], []>} : vector<8x16xf32>, vector<16x72xf32>, vector<8x72xf32> -> vector<8x72xf32>
    %18 = arith.addf %12, %17 : vector<8x72xf32>
    %c0_20 = arith.constant 0 : index
    %c0_21 = arith.constant 0 : index
    %c0_22 = arith.constant 0 : index
    %c10 = arith.constant 10 : index
    %19 = vector.load %arg2[%c0_20, %c0_21, %c0_22, %c10] : memref<1x1x16x90xf32, #tpu.memory_space<vmem>>, vector<1x1x16x72xf32>
    %20 = vector.shape_cast %19 : vector<1x1x16x72xf32> to vector<16x72xf32>
    %c3 = arith.constant 3 : index
    %c0_23 = arith.constant 0 : index
    %c0_24 = arith.constant 0 : index
    %21 = vector.load %arg3[%c3, %c0_23, %c0_24] : memref<4x8x16xf32, #tpu.memory_space<vmem>>, vector<1x8x16xf32>
    %22 = vector.shape_cast %21 : vector<1x8x16xf32> to vector<8x16xf32>
    %cst_25 = arith.constant dense<0.000000e+00> : vector<8x72xf32>
    %23 = tpu.matmul %22, %20, %cst_25 {dimension_numbers = #tpu.dot_dimension_numbers<[1], [0], [0], [1], [0, 0, 1, 1], [], []>} : vector<8x16xf32>, vector<16x72xf32>, vector<8x72xf32> -> vector<8x72xf32>
    %24 = arith.addf %18, %23 : vector<8x72xf32>
    %c0_26 = arith.constant 0 : index
    %c0_27 = arith.constant 0 : index
    %c0_28 = arith.constant 0 : index
    %c0_29 = arith.constant 0 : index
    %25 = vector.load %arg4[%c0_26, %c0_27, %c0_28, %c0_29] : memref<1x1x8x72xf32, #tpu.memory_space<vmem>>, vector<1x1x8x72xf32>
    %26 = vector.shape_cast %25 : vector<1x1x8x72xf32> to vector<8x72xf32>
    %27 = vector.shape_cast %24 : vector<8x72xf32> to vector<1x1x8x72xf32>
    tpu.vector_store %arg4[%c0_26, %c0_27, %c0_28, %c0_29], %27 {strides = array<i32>} : memref<1x1x8x72xf32, #tpu.memory_space<vmem>>, vector<1x1x8x72xf32>,
    return
  }
  func.func @transform_0(%arg0: i32, %arg1: i32) -> (i32, i32, i32, i32) {
    %c0_i32 = arith.constant 0 : i32
    %c0_i32_0 = arith.constant 0 : i32
    %c0_i32_1 = arith.constant 0 : i32
    return %arg0, %arg1, %c0_i32, %c0_i32_0 : i32, i32, i32, i32
  }
  func.func @transform_1(%arg0: i32, %arg1: i32) -> (i32, i32, i32) {
    %c0_i32 = arith.constant 0 : i32
    %c0_i32_0 = arith.constant 0 : i32
    %c0_i32_1 = arith.constant 0 : i32
    %c0_i32_2 = arith.constant 0 : i32
    return %c0_i32, %c0_i32_0, %c0_i32_1 : i32, i32, i32
  }
  func.func @transform_2(%arg0: i32, %arg1: i32) -> (i32, i32, i32, i32) {
    %c0_i32 = arith.constant 0 : i32
    %c0_i32_0 = arith.constant 0 : i32
    %c0_i32_1 = arith.constant 0 : i32
    return %arg0, %arg1, %c0_i32, %c0_i32_0 : i32, i32, i32, i32
  }
}

</mosaic_0001>

<llo_original>
// kernel: tpu_custom_call.1
$region0: #{tpu_custom_call.1}
  #allocation0 [shape = 'u32[]', space=smem, size = 0x4, offset = 0x4, fixed_abs, tag = 'smem constant byte address 0x4 - core index']
  #allocation1 [shape = 'u32[72,128]{1,0:T(1,128)}', space=vmem, size = 0x9000, scoped, tag = 'internal scratch']
  %s0 = inlined_call_operand.hbm [shape: f32[2,1,16,90], index: 0, kind: input, shape index: {}]
  %s1 = inlined_call_operand.hbm [shape: f32[4,8,16], index: 1, kind: input, shape index: {}]
  %s2 = inlined_call_operand.hbm [shape: f32[2,1,8,72], index: 2, kind: output, shape index: {}]
  %s3 = sld [smem:[#allocation0]]
  $region49: #{tpu_custom_call.1} parent=0
    _
  %s5 = ssub.s32 1, %s3
  %s6 = scalar_select 0, %s5, %s3
  $region1: #{tpu_custom_call.1} parent=0
    #allocation2 [shape = 'u8[16384]{0}', space=vmem, size = 0x4000, scoped, tag = 'input window, operand 0']
    #allocation3 [shape = 's32[2]{0}', space=sflag, size = 0x8, scoped, tag = 'scoped memory for tpu_custom_call.1']
    #allocation4 [shape = 's32[2]{0}', space=sflag, size = 0x8, scoped, tag = 'scoped memory for tpu_custom_call.1']
    #allocation5 [shape = 'u8[16384]{0}', space=vmem, size = 0x4000, scoped, tag = 'input window, operand 1, single buffered']
    #allocation6 [shape = 's32[1]{0}', space=sflag, size = 0x4, scoped, tag = 'scoped memory for tpu_custom_call.1']
    #allocation7 [shape = 'u8[8192]{0}', space=vmem, size = 0x2000, scoped, tag = 'output window, operand 0']
    %7 = vsyncpa [#allocation3], 0
    %s8 = scalar_lea.sflag [#allocation3], 1
    %9 = vsyncpa %s8, 0
    %10 = vsyncpa [#allocation6], 0
    %11 = vsyncpa [#allocation4], 0
    %s12 = scalar_lea.sflag [#allocation4], 1
    %13 = vsyncpa %s12, 0
    loop: start=0, step=1, limit=4
    $region2: #{tpu_custom_call.1} parent=1 // loop_pre_header
      _
    $region3: #{tpu_custom_call.1} parent=1 // loop_header
      %s15 = sphi 0, %s19
      %p16 = scmp.ge.s32.totalorder %s15, 4
      %s22 = sphi 0, %s34
      %s23 = sphi 0, %s30
      %s24 = sphi 0, %s22
      %s25 = sphi 0, %s23
      %s26 = sphi 0, %s24
      %s27 = sphi 0, %s25
      %s39 = sphi 0, %s41
      %s42 = sphi 0, %s39
      %s43 = sphi 0, %s42
      %s59 = sphi 0, %s43
      %s63 = sphi 0, %s63
      %s65 = sphi 0, %s63
      %s66 = sphi 0, %s65
      %s80 = sphi 0, %s66
      %s88 = sphi 0, %s90
      %s91 = sphi 0, %s88
      %s92 = sphi 0, %s91
      %s108 = sphi 0, %s92
    $region4: #{tpu_custom_call.1} parent=1 // loop_header_branch
      %18 = sbr.rel (%p16) target = $region8
    $region5: #{tpu_custom_call.1} parent=1 // loop_body
      %s20 = ssub.s32 %s15, 1
      %s21 = ssub.s32 %s15, 2
      %s28 = sadd.s32 1, %s23
      %p29 = scmp.ge.s32.totalorder %s28, 1
      %s30 = scalar_select %p29, 0, %s28
      %s31 = sadd.s32 1, %s22
      %s32 = scalar_select %p29, %s31, %s22
      %p33 = scmp.ge.s32.totalorder %s32, 2
      %s34 = scalar_select %p33, 0, %s32
      %s35 = ssub.s32 %s22, %s34
      %s36 = ssub.s32 %s23, %s30
      %s37 = sor.u32 %s35, %s36
      %p38 = scmp.eq.s32.totalorder %s37, 0
      %s40 = sadd.s32 %s39, 1
      %s41 = scalar_select %p38, %s39, %s40
      %p44 = pneg %p38
      %p45 = scmp.eq.s32.totalorder %s15, 1
      %p46 = por %p44, %p45
      %p47 = scmp.ne.s32.totalorder %s39, %s42
      %p48 = scmp.eq.s32.totalorder %s15, 0
      %p49 = por %p47, %p48
      %p50 = scmp.ne.s32.totalorder %s39, %s42
      %p51 = scmp.eq.s32.totalorder %s20, 1
      %p52 = por %p50, %p51
      %p53 = scmp.ne.s32.totalorder %s42, %s43
      %p54 = scmp.eq.s32.totalorder %s20, 0
      %p55 = por %p53, %p54
      %p56 = scmp.ne.s32.totalorder %s42, %s43
      %p57 = scmp.eq.s32.totalorder %s21, 1
      %p58 = por %p56, %p57
      %p60 = scmp.ne.s32.totalorder %s43, %s59
      %p61 = scmp.eq.s32.totalorder %s21, 0
      %p62 = por %p60, %p61
      %s64 = sadd.s32 %s63, 1
      %p67 = scmp.eq.s32.totalorder %s15, 1
      %p68 = scmp.ne.s32.totalorder %s63, %s65
      %p69 = scmp.eq.s32.totalorder %s15, 0
      %p70 = por %p68, %p69
      %p71 = scmp.ne.s32.totalorder %s63, %s65
      %p72 = scmp.eq.s32.totalorder %s20, 1
      %p73 = por %p71, %p72
      %p74 = scmp.ne.s32.totalorder %s65, %s66
      %p75 = scmp.eq.s32.totalorder %s20, 0
      %p76 = por %p74, %p75
      %p77 = scmp.ne.s32.totalorder %s65, %s66
      %p78 = scmp.eq.s32.totalorder %s21, 1
      %p79 = por %p77, %p78
      %p81 = scmp.ne.s32.totalorder %s66, %s80
      %p82 = scmp.eq.s32.totalorder %s21, 0
      %p83 = por %p81, %p82
      %s84 = ssub.s32 %s22, %s34
      %s85 = ssub.s32 %s23, %s30
      %s86 = sor.u32 %s84, %s85
      %p87 = scmp.eq.s32.totalorder %s86, 0
      %s89 = sadd.s32 %s88, 1
      %s90 = scalar_select %p87, %s88, %s89
      %p93 = pneg %p87
      %p94 = scmp.eq.s32.totalorder %s15, 1
      %p95 = por %p93, %p94
      %p96 = scmp.ne.s32.totalorder %s88, %s91
      %p97 = scmp.eq.s32.totalorder %s15, 0
      %p98 = por %p96, %p97
      %p99 = scmp.ne.s32.totalorder %s88, %s91
      %p100 = scmp.eq.s32.totalorder %s20, 1
      %p101 = por %p99, %p100
      %p102 = scmp.ne.s32.totalorder %s91, %s92
      %p103 = scmp.eq.s32.totalorder %s20, 0
      %p104 = por %p102, %p103
      %p105 = scmp.ne.s32.totalorder %s91, %s92
      %p106 = scmp.eq.s32.totalorder %s21, 1
      %p107 = por %p105, %p106
      %p109 = scmp.ne.s32.totalorder %s92, %s108
      %p110 = scmp.eq.s32.totalorder %s21, 0
      %p111 = por %p109, %p110
      %p112 = scmp.le.s32.totalorder 1, %s15
      %p113 = scmp.lt.s32.totalorder %s15, 3
      %p114 = pnand %p112, %p113
      %p115 = pneg %p114
      // Predicated region
      $region9: #{tpu_custom_call.1} parent=5 // pred_check
        _
      $region10: #{tpu_custom_call.1} parent=5 // pred_check_branch
        %117 = sbr.rel (%p114) target = $region12
      $region11: #{tpu_custom_call.1} parent=5 // pred_region
        %s118 = ssub.s32 %s15, 1
        // Predicated region
        $region13: #{tpu_custom_call.1} parent=11 // pred_check
          %p119 = pneg %p76
        $region14: #{tpu_custom_call.1} parent=11 // pred_check_branch
          %121 = sbr.rel (%p119) target = $region16
        $region15: #{tpu_custom_call.1} parent=11 // pred_region
          %123 = vsyncadd [#allocation6], 0
          %s124 = sshll.u32 %s1, 4
          %s125 = int_to_ptr.hbm [resolvable:$true] %s124
          %s126 = sshll.u32 [#allocation5], 4
          %s127 = int_to_ptr.vmem [resolvable:$true] %s126
          %132 = dma.hbm_to_vmem [thread:$0]  %s125, 512, %s127, [#allocation6], 128, 128, 8
        $region16: #{tpu_custom_call.1} parent=11 // pred_fallthru
          _
      $region12: #{tpu_custom_call.1} parent=5 // pred_fallthru
        _
      %p133 = scmp.lt.s32.totalorder %s15, 2
      // Predicated region
      $region17: #{tpu_custom_call.1} parent=5 // pred_check
        %p134 = pneg %p133
      $region18: #{tpu_custom_call.1} parent=5 // pred_check_branch
        %136 = sbr.rel (%p134) target = $region20
      $region19: #{tpu_custom_call.1} parent=5 // pred_region
        // Predicated region
        $region21: #{tpu_custom_call.1} parent=19 // pred_check
          %p137 = pneg %p49
        $region22: #{tpu_custom_call.1} parent=19 // pred_check_branch
          %139 = sbr.rel (%p137) target = $region24
        $region23: #{tpu_custom_call.1} parent=19 // pred_region
          %s140 = sand.u32 %s39, 1
          %s141 = scalar_lea.sflag [#allocation3], %s140
          %s142 = sand.u32 %s39, 1
          %s143 = smul.addr %s142, 16
          %s144 = scalar_lea.vmem [#allocation2], %s143
          %146 = vsyncadd %s141, 0
          %s147 = smul.addr %s23, 2
          %s148 = smul.addr %s22, 2
          %s149 = sadd.s32 %s147, %s148
          %s150 = smul.addr %s149, 8
          %s151 = scalar_lea.hbm %s0, %s150
          %s152 = sshll.u32 %s151, 4
          %s153 = int_to_ptr.hbm [resolvable:$true] %s152
          %s154 = sshll.u32 %s144, 4
          %s155 = int_to_ptr.vmem [resolvable:$true] %s154
          %160 = dma.hbm_to_vmem [thread:$0]  %s153, 256, %s155, %s141, 128, 128, 8
        $region24: #{tpu_custom_call.1} parent=19 // pred_fallthru
          _
      $region20: #{tpu_custom_call.1} parent=5 // pred_fallthru
        _
      %p161 = scmp.le.s32.totalorder 1, %s15
      %p162 = scmp.lt.s32.totalorder %s15, 3
      %p163 = pnand %p161, %p162
      %p164 = pneg %p163
      // Predicated region
      $region25: #{tpu_custom_call.1} parent=5 // pred_check
        _
      $region26: #{tpu_custom_call.1} parent=5 // pred_check_branch
        %166 = sbr.rel (%p163) target = $region28
      $region27: #{tpu_custom_call.1} parent=5 // pred_region
        %s167 = ssub.s32 %s15, 1
        %s168 = sand.u32 %s42, 1
        %s169 = scalar_lea.sflag [#allocation3], %s168
        %s170 = sand.u32 %s42, 1
        %s171 = smul.addr %s170, 16
        %s172 = scalar_lea.vmem [#allocation2], %s171
        // Predicated region
        $region29: #{tpu_custom_call.1} parent=27 // pred_check
          %p173 = pneg %p55
        $region30: #{tpu_custom_call.1} parent=27 // pred_check_branch
          %175 = sbr.rel (%p173) target = $region32
        $region31: #{tpu_custom_call.1} parent=27 // pred_region
          %177 = dma.done %s169, 256
        $region32: #{tpu_custom_call.1} parent=27 // pred_fallthru
          _
        // Predicated region
        $region33: #{tpu_custom_call.1} parent=27 // pred_check
          %p178 = pneg %p76
        $region34: #{tpu_custom_call.1} parent=27 // pred_check_branch
          %180 = sbr.rel (%p178) target = $region36
        $region35: #{tpu_custom_call.1} parent=27 // pred_region
          %182 = dma.done [#allocation6], 512
        $region36: #{tpu_custom_call.1} parent=27 // pred_fallthru
          _
        %s183 = sand.u32 %s42, 1
        %s184 = scalar_lea.sflag [#allocation3], %s183
        %s185 = sand.u32 %s42, 1
        %s186 = smul.addr %s185, 16
        %s187 = scalar_lea.vmem [#allocation2], %s186
        %p188 = pneg %p55
        %p189 = pneg %p52
        %p190 = pneg %p76
        %p191 = pneg %p73
        %p192 = pneg %p104
        %p193 = pneg %p101
        %s194 = sand.u32 %s91, 1
        %s195 = scalar_lea.sflag [#allocation4], %s194
        %s196 = sand.u32 %s91, 1
        %s197 = smul.addr %s196, 8
        %s198 = scalar_lea.vmem [#allocation7], %s197
        %v199 = vld [vmem:[%s172] sm:$0xff]
        %v200 = vld [vmem:[%s172 + $0x8] sm:$0xff]
        %v201 = vld [vmem:[#allocation5] sm:$0xff]
        %s202 = scalar_lea.vmem [#allocation5], 8
        %v203 = vld [vmem:[%s202] sm:$0xff]
        %206 = vrot.lane.b32.xlu0 %v199, 127
        %v207 = vpop.permute.xlu0 %206
        %208 = vrot.lane.b32.xlu0 %v200, 127
        %v209 = vpop.permute.xlu0 %208
        %vm212 = vcmask 130048
        %v214 = vsel %vm212, %v203, 0
        %216 = vmatpush.msra.mxu0 0.0
        %217 = vmatpush.msra.mxu0 0.0
        %218 = vmatpush.msra.mxu0 0.0
        %219 = vmatpush.msra.mxu0 0.0
        %220 = vmatpush.msra.mxu0 0.0
        %221 = vmatpush.msra.mxu0 0.0
        %222 = vmatpush.msra.mxu0 0.0
        %223 = vmatpush.msra.mxu0 0.0
        %224 = vmatpush.msra.mxu0 0.0
        %225 = vmatpush.msra.mxu0 0.0
        %226 = vmatpush.msra.mxu0 0.0
        %227 = vmatpush.msra.mxu0 0.0
        %228 = vmatpush.msra.mxu0 0.0
        %229 = vmatpush.msra.mxu0 0.0
        %230 = vmatpush.msra.mxu0 %v209
        %231 = vmatpush.msra.mxu0 %v207
        %232 = vmatmul.f32.gmra.mxu0 %v214
        %v233 = vpop.f32.mrf.mxu0
        %v234 = vadd.f32 0.0, %v233
        %235 = vdwg.mxu0
        %v237 = vsel %vm212, %v201, 0
        %239 = vmatpush.msra.mxu0 0.0
        %240 = vmatpush.msra.mxu0 0.0
        %241 = vmatpush.msra.mxu0 0.0
        %242 = vmatpush.msra.mxu0 0.0
        %243 = vmatpush.msra.mxu0 0.0
        %244 = vmatpush.msra.mxu0 0.0
        %245 = vmatpush.msra.mxu0 0.0
        %246 = vmatpush.msra.mxu0 0.0
        %247 = vmatpush.msra.mxu0 0.0
        %248 = vmatpush.msra.mxu0 0.0
        %249 = vmatpush.msra.mxu0 0.0
        %250 = vmatpush.msra.mxu0 0.0
        %251 = vmatpush.msra.mxu0 0.0
        %252 = vmatpush.msra.mxu0 0.0
        %253 = vmatpush.msra.mxu0 %v200
        %254 = vmatpush.msra.mxu0 %v199
        %255 = vmatmul.f32.gmra.mxu0 %v237
        %v256 = vpop.f32.mrf.mxu0
        %v257 = vadd.f32 %v234, %v256
        %258 = vdwg.mxu0
        %s259 = scalar_lea.vmem [#allocation5], 16
        %v260 = vld [vmem:[%s259] sm:$0xff]
        %261 = vrot.lane.b32.xlu0 %v199, 119
        %v262 = vpop.permute.xlu0 %261
        %263 = vrot.lane.b32.xlu0 %v200, 119
        %v264 = vpop.permute.xlu0 %263
        %v268 = vsel %vm212, %v260, 0
        %270 = vmatpush.msra.mxu0 0.0
        %271 = vmatpush.msra.mxu0 0.0
        %272 = vmatpush.msra.mxu0 0.0
        %273 = vmatpush.msra.mxu0 0.0
        %274 = vmatpush.msra.mxu0 0.0
        %275 = vmatpush.msra.mxu0 0.0
        %276 = vmatpush.msra.mxu0 0.0
        %277 = vmatpush.msra.mxu0 0.0
        %278 = vmatpush.msra.mxu0 0.0
        %279 = vmatpush.msra.mxu0 0.0
        %280 = vmatpush.msra.mxu0 0.0
        %281 = vmatpush.msra.mxu0 0.0
        %282 = vmatpush.msra.mxu0 0.0
        %283 = vmatpush.msra.mxu0 0.0
        %284 = vmatpush.msra.mxu0 %v264
        %285 = vmatpush.msra.mxu0 %v262
        %286 = vmatmul.f32.gmra.mxu0 %v268
        %v287 = vpop.f32.mrf.mxu0
        %v288 = vadd.f32 0.0, %v287
        %289 = vdwg.mxu0
        %v290 = vadd.f32 %v257, %v288
        %s291 = scalar_lea.vmem [#allocation5], 24
        %v292 = vld [vmem:[%s291] sm:$0xff]
        %293 = vrot.lane.b32.xlu0 %v199, 118
        %v294 = vpop.permute.xlu0 %293
        %295 = vrot.lane.b32.xlu0 %v200, 118
        %v296 = vpop.permute.xlu0 %295
        %v300 = vsel %vm212, %v292, 0
        %302 = vmatpush.msra.mxu0 0.0
        %303 = vmatpush.msra.mxu0 0.0
        %304 = vmatpush.msra.mxu0 0.0
        %305 = vmatpush.msra.mxu0 0.0
        %306 = vmatpush.msra.mxu0 0.0
        %307 = vmatpush.msra.mxu0 0.0
        %308 = vmatpush.msra.mxu0 0.0
        %309 = vmatpush.msra.mxu0 0.0
        %310 = vmatpush.msra.mxu0 0.0
        %311 = vmatpush.msra.mxu0 0.0
        %312 = vmatpush.msra.mxu0 0.0
        %313 = vmatpush.msra.mxu0 0.0
        %314 = vmatpush.msra.mxu0 0.0
        %315 = vmatpush.msra.mxu0 0.0
        %316 = vmatpush.msra.mxu0 %v296
        %317 = vmatpush.msra.mxu0 %v294
        %318 = vmatmul.f32.gmra.mxu0 %v300
        %v319 = vpop.f32.mrf.mxu0
        %v320 = vadd.f32 0.0, %v319
        %321 = vdwg.mxu0
        %v322 = vadd.f32 %v290, %v320
        %vm323 = vcmask 588800
        %324 = vst.msk [vmem:[%s198] sm:$0xff] %vm323, %v322
        %s325 = sand.u32 %s91, 1
        %s326 = scalar_lea.sflag [#allocation4], %s325
        %s327 = sand.u32 %s91, 1
        %s328 = smul.addr %s327, 8
        %s329 = scalar_lea.vmem [#allocation7], %s328
        // Predicated region
        $region37: #{tpu_custom_call.1} parent=27 // pred_check
          %p330 = pneg %p101
        $region38: #{tpu_custom_call.1} parent=27 // pred_check_branch
          %332 = sbr.rel (%p330) target = $region40
        $region39: #{tpu_custom_call.1} parent=27 // pred_region
          %334 = vsyncadd %s326, 0
          %s335 = sadd.s32 %s25, %s24
          %s336 = smul.addr %s335, 8
          %s337 = scalar_lea.hbm %s2, %s336
          %s339 = sshll.u32 %s329, 4
          %s340 = int_to_ptr.vmem [resolvable:$true] %s339
          %s341 = sshll.u32 %s337, 4
          %s342 = int_to_ptr.hbm [resolvable:$true] %s341
          %344 = dma.vmem_to_hbm [thread:$0]  %s340, 128, %s342, %s326
        $region40: #{tpu_custom_call.1} parent=27 // pred_fallthru
          _
      $region28: #{tpu_custom_call.1} parent=5 // pred_fallthru
        _
      %p345 = scmp.le.s32.totalorder 2, %s15
      // Predicated region
      $region41: #{tpu_custom_call.1} parent=5 // pred_check
        %p346 = pneg %p345
      $region42: #{tpu_custom_call.1} parent=5 // pred_check_branch
        %348 = sbr.rel (%p346) target = $region44
      $region43: #{tpu_custom_call.1} parent=5 // pred_region
        %s349 = ssub.s32 %s15, 2
        // Predicated region
        $region45: #{tpu_custom_call.1} parent=43 // pred_check
          %p350 = pneg %p107
        $region46: #{tpu_custom_call.1} parent=43 // pred_check_branch
          %352 = sbr.rel (%p350) target = $region48
        $region47: #{tpu_custom_call.1} parent=43 // pred_region
          %s353 = sand.u32 %s92, 1
          %s354 = scalar_lea.sflag [#allocation4], %s353
          %s355 = sand.u32 %s92, 1
          %s356 = smul.addr %s355, 8
          %s357 = scalar_lea.vmem [#allocation7], %s356
          %359 = dma.done %s354, 128
        $region48: #{tpu_custom_call.1} parent=43 // pred_fallthru
          _
      $region44: #{tpu_custom_call.1} parent=5 // pred_fallthru
        _
    $region6: #{tpu_custom_call.1} parent=1 // loop_footer
      %s19 = sadd.s32 1, %s15
    $region7: #{tpu_custom_call.1} parent=1 // loop_footer_branch
      %14 = sbr.rel target = $region3
    $region8: #{tpu_custom_call.1} parent=1 // loop_exit
      _
    %360 = vsyncpa [#allocation3], 1
    %s361 = scalar_lea.sflag [#allocation3], 1
    %362 = vsyncpa %s361, 1
    %363 = vsyncpa [#allocation6], 1
    %364 = vsyncpa [#allocation4], 1
    %s365 = scalar_lea.sflag [#allocation4], 1
    %366 = vsyncpa %s365, 1

</llo_original>
